<compile_context>
chip_gen: v7x
topology: tpu7x:2x2x1
jax: 0.10.0
libtpu: 0.0.40
codegen_flags: <defaults>
</compile_context>

<pallas_src>
import math

import jax
import jax.numpy as jnp
from jax.experimental import pallas as pl
from jax.experimental.pallas import tpu as pltpu


def _round_up(x, m):
    return ((x + m - 1) // m) * m


def _gelu_exact(x):
    # Matches torch.nn.functional.gelu default (erf-based, exact), in f32.
    return 0.5 * x * (1.0 + jax.lax.erf(x * (1.0 / math.sqrt(2.0))))


def mlp_kernel(x_ref, w1_ref, b1_ref, w2_ref, b2_ref, o_ref, acc_ref):
    # x_ref:  (tm, d_model)        bf16 row tile of the token slab
    # w1_ref: (d_model, dff_tile)  bf16 chunk of W1 (columns k*dff_tile : ...)
    # b1_ref: (1, dff_tile)        f32
    # w2_ref: (dff_tile, d_model)  bf16 chunk of W2 (rows   k*dff_tile : ...)
    # b2_ref: (1, d_model)         f32
    # o_ref:  (tm, d_model)        output row tile
    # acc_ref:(tm, d_model)        f32 scratch accumulator (resident across k)
    k = pl.program_id(1)

    @pl.when(k == 0)
    def _():
        acc_ref[...] = jnp.zeros_like(acc_ref)

    # linear1 (bf16 x bf16 -> f32 accumulate) + bias + exact GELU, all for this
    # dff chunk only.
    h = jnp.dot(x_ref[...], w1_ref[...], preferred_element_type=jnp.float32)
    h = _gelu_exact(h + b1_ref[...])
    # dropout1: identity in eval mode.
    # TODO(synk): training-mode dropout would use pltpu.prng_seed + prng_random_bits.

    # linear2 partial contraction of this dff chunk into the f32 accumulator.
    acc_ref[...] += jnp.dot(h.astype(w2_ref.dtype), w2_ref[...],
                            preferred_element_type=jnp.float32)

    @pl.when(k == pl.num_programs(1) - 1)
    def _():
        # dropout2: identity in eval mode.
        o_ref[...] = (acc_ref[...] + b2_ref[...]).astype(o_ref.dtype)


def mlp_pallas(x, w1, b1, w2, b2, *, tm=256, dff_tile=1024, out_dtype=None):
    """x: (..., d_model). w1: (d_model, dff), w2: (dff, d_model). Returns (..., d_model)."""
    orig_shape = x.shape
    d_model = orig_shape[-1]
    dff = w1.shape[1]
    out_dtype = out_dtype if out_dtype is not None else x.dtype

    x2d = x.reshape(-1, d_model)
    n = x2d.shape[0]

    # Row tile: clamp to problem size, pad rows so the grid divides evenly.
    tm = min(tm, _round_up(n, 8))
    n_pad = _round_up(n, tm)
    if n_pad != n:
        x2d = jnp.pad(x2d, ((0, n_pad - n), (0, 0)))

    # Hidden-dim tile: clamp; fall back to un-tiled if it doesn't divide dff.
    dff_tile = min(dff_tile, dff)
    if dff % dff_tile != 0:
        dff_tile = dff

    # bf16 operands for the MXU; biases stay f32 (added on the f32 path).
    x_bf = x2d.astype(jnp.bfloat16)
    w1_bf = w1.astype(jnp.bfloat16)
    w2_bf = w2.astype(jnp.bfloat16)
    b1_2d = b1.reshape(1, dff).astype(jnp.float32)
    b2_2d = b2.reshape(1, d_model).astype(jnp.float32)

    grid = (n_pad // tm, dff // dff_tile)

    out = pl.pallas_call(
        mlp_kernel,
        out_shape=jax.ShapeDtypeStruct((n_pad, d_model), out_dtype),
        grid_spec=pltpu.PrefetchScalarGridSpec(
            num_scalar_prefetch=0,
            grid=grid,
            in_specs=[
                pl.BlockSpec((tm, d_model), lambda i, k: (i, 0)),
                pl.BlockSpec((d_model, dff_tile), lambda i, k: (0, k)),
                pl.BlockSpec((1, dff_tile), lambda i, k: (0, k)),
                pl.BlockSpec((dff_tile, d_model), lambda i, k: (k, 0)),
                pl.BlockSpec((1, d_model), lambda i, k: (0, 0)),
            ],
            out_specs=pl.BlockSpec((tm, d_model), lambda i, k: (i, 0)),
            scratch_shapes=[pltpu.VMEM((tm, d_model), jnp.float32)],
        ),
        compiler_params=pltpu.CompilerParams(
            dimension_semantics=("parallel", "arbitrary"),
            vmem_limit_bytes=64 * 1024 * 1024,
        ),
    )(x_bf, w1_bf, b1_2d, w2_bf, b2_2d)

    out = out[:n]
    return out.reshape(orig_shape[:-1] + (d_model,))


def init_mlp_params(key, d_model, dim_feedforward):
    """Deterministic init mirroring torch.nn.Linear defaults (Kaiming-uniform-ish)."""
    k1, k2, k3, k4 = jax.random.split(key, 4)
    bound1 = 1.0 / math.sqrt(d_model)
    bound2 = 1.0 / math.sqrt(dim_feedforward)
    # Stored already transposed for row-major matmul: W1 [d_model, dff], W2 [dff, d_model].
    w1 = jax.random.uniform(k1, (d_model, dim_feedforward), jnp.float32, -bound1, bound1)
    b1 = jax.random.uniform(k2, (dim_feedforward,), jnp.float32, -bound1, bound1)
    w2 = jax.random.uniform(k3, (dim_feedforward, d_model), jnp.float32, -bound2, bound2)
    b2 = jax.random.uniform(k4, (d_model,), jnp.float32, -bound2, bound2)
    return w1, b1, w2, b2


def mlp_reference_bf16(x, w1, b1, w2, b2):
    """Plain-JAX reference reproducing the kernel's bf16-matmul / f32-accumulate numerics."""
    xb = x.astype(jnp.bfloat16).astype(jnp.float32)
    w1b = w1.astype(jnp.bfloat16).astype(jnp.float32)
    w2b = w2.astype(jnp.bfloat16).astype(jnp.float32)
    h = _gelu_exact(xb @ w1b + b1)
    h = h.astype(jnp.bfloat16).astype(jnp.float32)
    return h @ w2b + b2


if __name__ == "__main__":
    batch, seq, d_model, dim_feedforward = 2, 8, 128, 256

    key = jax.random.PRNGKey(0)
    kx, kp = jax.random.split(key)
    src = jax.random.normal(kx, (batch, seq, d_model), jnp.float32)
    w1, b1, w2, b2 = init_mlp_params(kp, d_model, dim_feedforward)

    # Small dff_tile here just to exercise the reduction grid axis (2 k-steps).
    out = mlp_pallas(src, w1, b1, w2, b2, tm=256, dff_tile=128)
    jax.block_until_ready(out)

    # Sanity check against a plain-JAX reference with matching bf16 rounding.
    x2d = src.reshape(batch * seq, d_model)
    ref = mlp_reference_bf16(x2d, w1, b1, w2, b2).reshape(batch, seq, d_model)
    assert out.shape == (batch, seq, d_model)
    assert jnp.allclose(out, ref, atol=2e-2, rtol=2e-2), "mismatch vs reference"

    print("KERNEL_OK")
</pallas_src>

<mosaic_0001>
module attributes {stable_mosaic.version = 11 : i64} {
  func.func @mlp_kernel(%arg0: i32, %arg1: i32, %arg2: memref<16x128xbf16, #tpu.memory_space<vmem>>, %arg3: memref<128x128xbf16, #tpu.memory_space<vmem>>, %arg4: memref<1x128xf32, #tpu.memory_space<vmem>>, %arg5: memref<128x128xbf16, #tpu.memory_space<vmem>>, %arg6: memref<1x128xf32, #tpu.memory_space<vmem>>, %arg7: memref<16x128xf32, #tpu.memory_space<vmem>>, %arg8: memref<16x128xf32, #tpu.memory_space<vmem>>) attributes {dimension_semantics = [#tpu.dimension_semantics<parallel>, #tpu.dimension_semantics<arbitrary>], iteration_bounds = array<i64: 1, 2>, scalar_prefetch = 0 : i64, scratch_operands = 1 : i64, tpu.core_type = #tpu.core_type<tc>, window_params = [{transform_indices = @transform_0, window_bounds = array<i64: 16, 128>}, {transform_indices = @transform_1, window_bounds = array<i64: 128, 128>}, {transform_indices = @transform_2, window_bounds = array<i64: 1, 128>}, {transform_indices = @transform_3, window_bounds = array<i64: 128, 128>}, {pipeline_mode = #tpu.pipeline_mode<synchronous>, transform_indices = @transform_4, window_bounds = array<i64: 1, 128>}, {transform_indices = @transform_5, window_bounds = array<i64: 16, 128>}]} {
    %c0_i32 = arith.constant 0 : i32
    %0 = arith.cmpi eq, %arg1, %c0_i32 : i32
    %1 = arith.extui %0 : i1 to i32
    %c0_i32_0 = arith.constant 0 : i32
    %2 = arith.cmpi ne, %1, %c0_i32_0 : i32
    scf.if %2 {
      %cst_17 = arith.constant 0.000000e+00 : f32
      %26 = vector.broadcast %cst_17 : f32 to vector<16x128xf32>
      %c0_18 = arith.constant 0 : index
      %c0_19 = arith.constant 0 : index
      %27 = vector.load %arg8[%c0_18, %c0_19] : memref<16x128xf32, #tpu.memory_space<vmem>>, vector<16x128xf32>
      tpu.vector_store %arg8[%c0_18, %c0_19], %26 {strides = array<i32>} : memref<16x128xf32, #tpu.memory_space<vmem>>, vector<16x128xf32>,
    } else {
    }
    %c0 = arith.constant 0 : index
    %c0_1 = arith.constant 0 : index
    %3 = vector.load %arg2[%c0, %c0_1] : memref<16x128xbf16, #tpu.memory_space<vmem>>, vector<16x128xbf16>
    %c0_2 = arith.constant 0 : index
    %c0_3 = arith.constant 0 : index
    %4 = vector.load %arg3[%c0_2, %c0_3] : memref<128x128xbf16, #tpu.memory_space<vmem>>, vector<128x128xbf16>
    %cst = arith.constant dense<0.000000e+00> : vector<16x128xf32>
    %5 = tpu.matmul %3, %4, %cst {dimension_numbers = #tpu.dot_dimension_numbers<[1], [0], [0], [1], [0, 0, 1, 1], [], []>} : vector<16x128xbf16>, vector<128x128xbf16>, vector<16x128xf32> -> vector<16x128xf32>
    %c0_4 = arith.constant 0 : index
    %c0_5 = arith.constant 0 : index
    %6 = vector.load %arg4[%c0_4, %c0_5] : memref<1x128xf32, #tpu.memory_space<vmem>>, vector<1x128xf32>
    %7 = vector.broadcast %6 : vector<1x128xf32> to vector<16x128xf32>
    %8 = arith.addf %5, %7 : vector<16x128xf32>
    %cst_6 = arith.constant 5.000000e-01 : f32
    %9 = vector.broadcast %cst_6 : f32 to vector<16x128xf32>
    %10 = arith.mulf %9, %8 : vector<16x128xf32>
    %cst_7 = arith.constant 0.707106769 : f32
    %11 = vector.broadcast %cst_7 : f32 to vector<16x128xf32>
    %12 = arith.mulf %8, %11 : vector<16x128xf32>
    %13 = math.erf %12 : vector<16x128xf32>
    %cst_8 = arith.constant 1.000000e+00 : f32
    %14 = vector.broadcast %cst_8 : f32 to vector<16x128xf32>
    %15 = arith.addf %14, %13 : vector<16x128xf32>
    %16 = arith.mulf %10, %15 : vector<16x128xf32>
    %c0_9 = arith.constant 0 : index
    %c0_10 = arith.constant 0 : index
    %17 = vector.load %arg8[%c0_9, %c0_10] : memref<16x128xf32, #tpu.memory_space<vmem>>, vector<16x128xf32>
    %18 = arith.truncf %16 : vector<16x128xf32> to vector<16x128xbf16>
    %c0_11 = arith.constant 0 : index
    %c0_12 = arith.constant 0 : index
    %19 = vector.load %arg5[%c0_11, %c0_12] : memref<128x128xbf16, #tpu.memory_space<vmem>>, vector<128x128xbf16>
    %cst_13 = arith.constant dense<0.000000e+00> : vector<16x128xf32>
    %20 = tpu.matmul %18, %19, %cst_13 {dimension_numbers = #tpu.dot_dimension_numbers<[1], [0], [0], [1], [0, 0, 1, 1], [], []>} : vector<16x128xbf16>, vector<128x128xbf16>, vector<16x128xf32> -> vector<16x128xf32>
    %21 = arith.addf %17, %20 : vector<16x128xf32>
    %c0_14 = arith.constant 0 : index
    %c0_15 = arith.constant 0 : index
    %22 = vector.load %arg8[%c0_14, %c0_15] : memref<16x128xf32, #tpu.memory_space<vmem>>, vector<16x128xf32>
    tpu.vector_store %arg8[%c0_14, %c0_15], %21 {strides = array<i32>} : memref<16x128xf32, #tpu.memory_space<vmem>>, vector<16x128xf32>,
    %c1_i32 = arith.constant 1 : i32
    %23 = arith.cmpi eq, %arg1, %c1_i32 : i32
    %24 = arith.extui %23 : i1 to i32
    %c0_i32_16 = arith.constant 0 : i32
    %25 = arith.cmpi ne, %24, %c0_i32_16 : i32
    scf.if %25 {
      %c0_17 = arith.constant 0 : index
      %c0_18 = arith.constant 0 : index
      %26 = vector.load %arg8[%c0_17, %c0_18] : memref<16x128xf32, #tpu.memory_space<vmem>>, vector<16x128xf32>
      %c0_19 = arith.constant 0 : index
      %c0_20 = arith.constant 0 : index
      %27 = vector.load %arg6[%c0_19, %c0_20] : memref<1x128xf32, #tpu.memory_space<vmem>>, vector<1x128xf32>
      %28 = vector.broadcast %27 : vector<1x128xf32> to vector<16x128xf32>
      %29 = arith.addf %26, %28 : vector<16x128xf32>
      %c0_21 = arith.constant 0 : index
      %c0_22 = arith.constant 0 : index
      %30 = vector.load %arg7[%c0_21, %c0_22] : memref<16x128xf32, #tpu.memory_space<vmem>>, vector<16x128xf32>
      tpu.vector_store %arg7[%c0_21, %c0_22], %29 {strides = array<i32>} : memref<16x128xf32, #tpu.memory_space<vmem>>, vector<16x128xf32>,
    } else {
    }
    return
  }
  func.func @transform_0(%arg0: i32, %arg1: i32) -> (i32, i32) {
    %c0_i32 = arith.constant 0 : i32
    %c0_i32_0 = arith.constant 0 : i32
    return %arg0, %c0_i32 : i32, i32
  }
  func.func @transform_1(%arg0: i32, %arg1: i32) -> (i32, i32) {
    %c0_i32 = arith.constant 0 : i32
    %c0_i32_0 = arith.constant 0 : i32
    return %c0_i32, %arg1 : i32, i32
  }
  func.func @transform_2(%arg0: i32, %arg1: i32) -> (i32, i32) {
    %c0_i32 = arith.constant 0 : i32
    %c0_i32_0 = arith.constant 0 : i32
    return %c0_i32, %arg1 : i32, i32
  }
  func.func @transform_3(%arg0: i32, %arg1: i32) -> (i32, i32) {
    %c0_i32 = arith.constant 0 : i32
    %c0_i32_0 = arith.constant 0 : i32
    return %arg1, %c0_i32 : i32, i32
  }
  func.func @transform_4(%arg0: i32, %arg1: i32) -> (i32, i32) {
    %c0_i32 = arith.constant 0 : i32
    %c0_i32_0 = arith.constant 0 : i32
    %c0_i32_1 = arith.constant 0 : i32
    return %c0_i32, %c0_i32_0 : i32, i32
  }
  func.func @transform_5(%arg0: i32, %arg1: i32) -> (i32, i32) {
    %c0_i32 = arith.constant 0 : i32
    %c0_i32_0 = arith.constant 0 : i32
    return %arg0, %c0_i32 : i32, i32
  }
}

</mosaic_0001>

<llo_original>
// kernel: tpu_custom_call.1
$region0: #{tpu_custom_call.1}
  #allocation0 [shape = 'u32[]', space=smem, size = 0x4, offset = 0x4, fixed_abs, tag = 'smem constant byte address 0x4 - core index']
  #allocation1 [shape = 'u32[144,128]{1,0:T(1,128)}', space=vmem, size = 0x12000, scoped, tag = 'internal scratch']
  #allocation2 [shape = 'f32[16,128]{1,0:T(8,128)}', space=vmem, size = 0x2000, scoped, tag = 'scratch operand']
  %s0 = inlined_call_operand.hbm [shape: bf16[16,128], index: 0, kind: input, shape index: {}]
  %s1 = inlined_call_operand.hbm [shape: bf16[128,256], index: 1, kind: input, shape index: {}]
  %s2 = inlined_call_operand.hbm [shape: f32[1,256], index: 2, kind: input, shape index: {}]
  %s3 = inlined_call_operand.hbm [shape: bf16[256,128], index: 3, kind: input, shape index: {}]
  %s4 = inlined_call_operand.hbm [shape: f32[1,128], index: 4, kind: input, shape index: {}]
  %s5 = inlined_call_operand.hbm [shape: f32[16,128], index: 5, kind: output, shape index: {}]
  %s6 = sld [smem:[#allocation0]]
  $region81: #{tpu_custom_call.1} parent=0
    _
  %s8 = ssub.s32 1, %s6
  %s9 = scalar_select 0, %s8, %s6
  $region1: #{tpu_custom_call.1} parent=0
    #allocation3 [shape = 'u8[4096]{0}', space=vmem, size = 0x1000, scoped, tag = 'input window, operand 0, single buffered']
    #allocation4 [shape = 's32[2]{0}', space=sflag, size = 0x8, scoped, tag = 'scoped memory for tpu_custom_call.1']
    #allocation5 [shape = 's32[2]{0}', space=sflag, size = 0x8, scoped, tag = 'scoped memory for tpu_custom_call.1']
    #allocation6 [shape = 'u8[65536]{0}', space=vmem, size = 0x10000, scoped, tag = 'input window, operand 1']
    #allocation7 [shape = 's32[2]{0}', space=sflag, size = 0x8, scoped, tag = 'scoped memory for tpu_custom_call.1']
    #allocation8 [shape = 'u8[1024]{0}', space=vmem, size = 0x400, scoped, tag = 'input window, operand 2']
    #allocation9 [shape = 'u8[65536]{0}', space=vmem, size = 0x10000, scoped, tag = 'input window, operand 3']
    #allocation10 [shape = 's32[2]{0}', space=sflag, size = 0x8, scoped, tag = 'scoped memory for tpu_custom_call.1']
    #allocation11 [shape = 'u8[512]{0}', space=vmem, size = 0x400, scoped, tag = 'input window, operand 4, single buffered']
    #allocation12 [shape = 'u8[8192]{0}', space=vmem, size = 0x2000, scoped, tag = 'output window, operand 0, single buffered']
    %10 = vsyncpa [#allocation4], 0
    %11 = vsyncpa [#allocation7], 0
    %s12 = scalar_lea.sflag [#allocation7], 1
    %13 = vsyncpa %s12, 0
    %14 = vsyncpa [#allocation10], 0
    %s15 = scalar_lea.sflag [#allocation10], 1
    %16 = vsyncpa %s15, 0
    %17 = vsyncpa [#allocation5], 0
    loop: start=0, step=1, limit=4
    $region2: #{tpu_custom_call.1} parent=1 // loop_pre_header
      _
    $region3: #{tpu_custom_call.1} parent=1 // loop_header
      %s19 = sphi 0, %s23
      %p20 = scmp.ge.s32.totalorder %s19, 4
      %s26 = sphi 0, %s38
      %s27 = sphi 0, %s34
      %s28 = sphi 0, %s26
      %s29 = sphi 0, %s27
      %s30 = sphi 0, %s28
      %s31 = sphi 0, %s29
      %s41 = sphi 0, %s43
      %s44 = sphi 0, %s41
      %s45 = sphi 0, %s44
      %s61 = sphi 0, %s45
      %s67 = sphi 0, %s69
      %s70 = sphi 0, %s67
      %s71 = sphi 0, %s70
      %s87 = sphi 0, %s71
      %s93 = sphi 0, %s95
      %s96 = sphi 0, %s93
      %s97 = sphi 0, %s96
      %s113 = sphi 0, %s97
      %s119 = sphi 0, %s121
      %s122 = sphi 0, %s119
      %s123 = sphi 0, %s122
      %s139 = sphi 0, %s123
      %s143 = sphi 0, %s143
      %s145 = sphi 0, %s143
      %s146 = sphi 0, %s145
      %s160 = sphi 0, %s146
      %s166 = sphi 0, %s168
      %s169 = sphi 0, %s166
      %s170 = sphi 0, %s169
      %s186 = sphi 0, %s170
    $region4: #{tpu_custom_call.1} parent=1 // loop_header_branch
      %22 = sbr.rel (%p20) target = $region8
    $region5: #{tpu_custom_call.1} parent=1 // loop_body
      %s24 = ssub.s32 %s19, 1
      %s25 = ssub.s32 %s19, 2
      %s32 = sadd.s32 1, %s27
      %p33 = scmp.ge.s32.totalorder %s32, 2
      %s34 = scalar_select %p33, 0, %s32
      %s35 = sadd.s32 1, %s26
      %s36 = scalar_select %p33, %s35, %s26
      %p37 = scmp.ge.s32.totalorder %s36, 1
      %s38 = scalar_select %p37, 0, %s36
      %s39 = ssub.s32 %s26, %s38
      %p40 = scmp.eq.s32.totalorder %s39, 0
      %s42 = sadd.s32 %s41, 1
      %s43 = scalar_select %p40, %s41, %s42
      %p46 = pneg %p40
      %p47 = scmp.eq.s32.totalorder %s19, 1
      %p48 = por %p46, %p47
      %p49 = scmp.ne.s32.totalorder %s41, %s44
      %p50 = scmp.eq.s32.totalorder %s19, 0
      %p51 = por %p49, %p50
      %p52 = scmp.ne.s32.totalorder %s41, %s44
      %p53 = scmp.eq.s32.totalorder %s24, 1
      %p54 = por %p52, %p53
      %p55 = scmp.ne.s32.totalorder %s44, %s45
      %p56 = scmp.eq.s32.totalorder %s24, 0
      %p57 = por %p55, %p56
      %p58 = scmp.ne.s32.totalorder %s44, %s45
      %p59 = scmp.eq.s32.totalorder %s25, 1
      %p60 = por %p58, %p59
      %p62 = scmp.ne.s32.totalorder %s45, %s61
      %p63 = scmp.eq.s32.totalorder %s25, 0
      %p64 = por %p62, %p63
      %s65 = ssub.s32 %s27, %s34
      %p66 = scmp.eq.s32.totalorder %s65, 0
      %s68 = sadd.s32 %s67, 1
      %s69 = scalar_select %p66, %s67, %s68
      %p72 = pneg %p66
      %p73 = scmp.eq.s32.totalorder %s19, 1
      %p74 = por %p72, %p73
      %p75 = scmp.ne.s32.totalorder %s67, %s70
      %p76 = scmp.eq.s32.totalorder %s19, 0
      %p77 = por %p75, %p76
      %p78 = scmp.ne.s32.totalorder %s67, %s70
      %p79 = scmp.eq.s32.totalorder %s24, 1
      %p80 = por %p78, %p79
      %p81 = scmp.ne.s32.totalorder %s70, %s71
      %p82 = scmp.eq.s32.totalorder %s24, 0
      %p83 = por %p81, %p82
      %p84 = scmp.ne.s32.totalorder %s70, %s71
      %p85 = scmp.eq.s32.totalorder %s25, 1
      %p86 = por %p84, %p85
      %p88 = scmp.ne.s32.totalorder %s71, %s87
      %p89 = scmp.eq.s32.totalorder %s25, 0
      %p90 = por %p88, %p89
      %s91 = ssub.s32 %s27, %s34
      %p92 = scmp.eq.s32.totalorder %s91, 0
      %s94 = sadd.s32 %s93, 1
      %s95 = scalar_select %p92, %s93, %s94
      %p98 = pneg %p92
      %p99 = scmp.eq.s32.totalorder %s19, 1
      %p100 = por %p98, %p99
      %p101 = scmp.ne.s32.totalorder %s93, %s96
      %p102 = scmp.eq.s32.totalorder %s19, 0
      %p103 = por %p101, %p102
      %p104 = scmp.ne.s32.totalorder %s93, %s96
      %p105 = scmp.eq.s32.totalorder %s24, 1
      %p106 = por %p104, %p105
      %p107 = scmp.ne.s32.totalorder %s96, %s97
      %p108 = scmp.eq.s32.totalorder %s24, 0
      %p109 = por %p107, %p108
      %p110 = scmp.ne.s32.totalorder %s96, %s97
      %p111 = scmp.eq.s32.totalorder %s25, 1
      %p112 = por %p110, %p111
      %p114 = scmp.ne.s32.totalorder %s97, %s113
      %p115 = scmp.eq.s32.totalorder %s25, 0
      %p116 = por %p114, %p115
      %s117 = ssub.s32 %s27, %s34
      %p118 = scmp.eq.s32.totalorder %s117, 0
      %s120 = sadd.s32 %s119, 1
      %s121 = scalar_select %p118, %s119, %s120
      %p124 = pneg %p118
      %p125 = scmp.eq.s32.totalorder %s19, 1
      %p126 = por %p124, %p125
      %p127 = scmp.ne.s32.totalorder %s119, %s122
      %p128 = scmp.eq.s32.totalorder %s19, 0
      %p129 = por %p127, %p128
      %p130 = scmp.ne.s32.totalorder %s119, %s122
      %p131 = scmp.eq.s32.totalorder %s24, 1
      %p132 = por %p130, %p131
      %p133 = scmp.ne.s32.totalorder %s122, %s123
      %p134 = scmp.eq.s32.totalorder %s24, 0
      %p135 = por %p133, %p134
      %p136 = scmp.ne.s32.totalorder %s122, %s123
      %p137 = scmp.eq.s32.totalorder %s25, 1
      %p138 = por %p136, %p137
      %p140 = scmp.ne.s32.totalorder %s123, %s139
      %p141 = scmp.eq.s32.totalorder %s25, 0
      %p142 = por %p140, %p141
      %s144 = sadd.s32 %s143, 1
      %p147 = scmp.eq.s32.totalorder %s19, 1
      %p148 = scmp.ne.s32.totalorder %s143, %s145
      %p149 = scmp.eq.s32.totalorder %s19, 0
      %p150 = por %p148, %p149
      %p151 = scmp.ne.s32.totalorder %s143, %s145
      %p152 = scmp.eq.s32.totalorder %s24, 1
      %p153 = por %p151, %p152
      %p154 = scmp.ne.s32.totalorder %s145, %s146
      %p155 = scmp.eq.s32.totalorder %s24, 0
      %p156 = por %p154, %p155
      %p157 = scmp.ne.s32.totalorder %s145, %s146
      %p158 = scmp.eq.s32.totalorder %s25, 1
      %p159 = por %p157, %p158
      %p161 = scmp.ne.s32.totalorder %s146, %s160
      %p162 = scmp.eq.s32.totalorder %s25, 0
      %p163 = por %p161, %p162
      %s164 = ssub.s32 %s26, %s38
      %p165 = scmp.eq.s32.totalorder %s164, 0
      %s167 = sadd.s32 %s166, 1
      %s168 = scalar_select %p165, %s166, %s167
      %p171 = pneg %p165
      %p172 = scmp.eq.s32.totalorder %s19, 1
      %p173 = por %p171, %p172
      %p174 = scmp.ne.s32.totalorder %s166, %s169
      %p175 = scmp.eq.s32.totalorder %s19, 0
      %p176 = por %p174, %p175
      %p177 = scmp.ne.s32.totalorder %s166, %s169
      %p178 = scmp.eq.s32.totalorder %s24, 1
      %p179 = por %p177, %p178
      %p180 = scmp.ne.s32.totalorder %s169, %s170
      %p181 = scmp.eq.s32.totalorder %s24, 0
      %p182 = por %p180, %p181
      %p183 = scmp.ne.s32.totalorder %s169, %s170
      %p184 = scmp.eq.s32.totalorder %s25, 1
      %p185 = por %p183, %p184
      %p187 = scmp.ne.s32.totalorder %s170, %s186
      %p188 = scmp.eq.s32.totalorder %s25, 0
      %p189 = por %p187, %p188
      %p190 = scmp.le.s32.totalorder 1, %s19
      %p191 = scmp.lt.s32.totalorder %s19, 3
      %p192 = pnand %p190, %p191
      %p193 = pneg %p192
      // Predicated region
      $region9: #{tpu_custom_call.1} parent=5 // pred_check
        _
      $region10: #{tpu_custom_call.1} parent=5 // pred_check_branch
        %195 = sbr.rel (%p192) target = $region12
      $region11: #{tpu_custom_call.1} parent=5 // pred_region
        %s196 = ssub.s32 %s19, 1
        // Predicated region
        $region13: #{tpu_custom_call.1} parent=11 // pred_check
          %p197 = pneg %p57
        $region14: #{tpu_custom_call.1} parent=11 // pred_check_branch
          %199 = sbr.rel (%p197) target = $region16
        $region15: #{tpu_custom_call.1} parent=11 // pred_region
          %s200 = smul.u32 2, %s28
          %s202 = ssub.s32 128, 128
          %203 = vsyncadd [#allocation4], %s202
          %s204 = smul.addr %s200, 64
          %s205 = scalar_lea.hbm %s0, %s204
          %s206 = sshll.u32 [#allocation3], 4
          %s207 = int_to_ptr.vmem [resolvable:$true] %s206
          %212 = dma.hbm_to_vmem [thread:$0]  %s205, 128, %s207, [#allocation4], 64, 64, 4
        $region16: #{tpu_custom_call.1} parent=11 // pred_fallthru
          _
        // Predicated region
        $region17: #{tpu_custom_call.1} parent=11 // pred_check
          %p213 = pneg %p156
        $region18: #{tpu_custom_call.1} parent=11 // pred_check_branch
          %215 = sbr.rel (%p213) target = $region20
        $region19: #{tpu_custom_call.1} parent=11 // pred_region
          %s217 = ssub.s32 16, 16
          %218 = vsyncadd [#allocation10], %s217
          %s220 = sshll.u32 [#allocation11], 4
          %s221 = int_to_ptr.vmem [resolvable:$true] %s220
          %223 = dma.hbm_to_vmem [thread:$0]  %s4, 16, %s221, [#allocation10]
        $region20: #{tpu_custom_call.1} parent=11 // pred_fallthru
          _
      $region12: #{tpu_custom_call.1} parent=5 // pred_fallthru
        _
      %p224 = scmp.lt.s32.totalorder %s19, 2
      // Predicated region
      $region21: #{tpu_custom_call.1} parent=5 // pred_check
        %p225 = pneg %p224
      $region22: #{tpu_custom_call.1} parent=5 // pred_check_branch
        %227 = sbr.rel (%p225) target = $region24
      $region23: #{tpu_custom_call.1} parent=5 // pred_region
        // Predicated region
        $region25: #{tpu_custom_call.1} parent=23 // pred_check
          %p228 = pneg %p77
        $region26: #{tpu_custom_call.1} parent=23 // pred_check_branch
          %230 = sbr.rel (%p228) target = $region28
        $region27: #{tpu_custom_call.1} parent=23 // pred_region
          %s231 = sand.u32 %s19, 1
          %s232 = scalar_lea.sflag [#allocation7], %s231
          %s233 = sand.u32 %s67, 1
          %s234 = smul.addr %s233, 64
          %s235 = scalar_lea.vmem [#allocation6], %s234
          %s237 = ssub.s32 1024, 1024
          %238 = vsyncadd %s232, %s237
          %s239 = smul.addr %s27, 64
          %s240 = scalar_lea.hbm %s1, %s239
          %s241 = sshll.u32 %s235, 4
          %s242 = int_to_ptr.vmem [resolvable:$true] %s241
          %247 = dma.hbm_to_vmem [thread:$0]  %s240, 1024, %s242, %s232, 128, 64, 4
        $region28: #{tpu_custom_call.1} parent=23 // pred_fallthru
          _
        // Predicated region
        $region29: #{tpu_custom_call.1} parent=23 // pred_check
          %p248 = pneg %p103
        $region30: #{tpu_custom_call.1} parent=23 // pred_check_branch
          %250 = sbr.rel (%p248) target = $region32
        $region31: #{tpu_custom_call.1} parent=23 // pred_region
          %s251 = sand.u32 %s19, 1
          %s252 = scalar_lea.sflag [#allocation7], %s251
          %s253 = sand.u32 %s93, 1
          %s254 = scalar_lea.vmem [#allocation8], %s253
          %s256 = ssub.s32 16, 16
          %257 = vsyncadd %s252, %s256
          %s258 = smul.addr %s27, 16
          %s259 = scalar_lea.hbm %s2, %s258
          %s261 = sshll.u32 %s254, 4
          %s262 = int_to_ptr.vmem [resolvable:$true] %s261
          %264 = dma.hbm_to_vmem [thread:$0]  %s259, 16, %s262, %s252
        $region32: #{tpu_custom_call.1} parent=23 // pred_fallthru
          _
        // Predicated region
        $region33: #{tpu_custom_call.1} parent=23 // pred_check
          %p265 = pneg %p129
        $region34: #{tpu_custom_call.1} parent=23 // pred_check_branch
          %267 = sbr.rel (%p265) target = $region36
        $region35: #{tpu_custom_call.1} parent=23 // pred_region
          %s268 = sand.u32 %s19, 1
          %s269 = scalar_lea.sflag [#allocation10], %s268
          %s270 = sand.u32 %s119, 1
          %s271 = smul.addr %s270, 64
          %s272 = scalar_lea.vmem [#allocation9], %s271
          %s273 = smul.u32 16, %s27
          %s275 = ssub.s32 1024, 1024
          %276 = vsyncadd %s269, %s275
          %s277 = smul.addr %s273, 64
          %s278 = scalar_lea.hbm %s3, %s277
          %s279 = sshll.u32 %s272, 4
          %s280 = int_to_ptr.vmem [resolvable:$true] %s279
          %285 = dma.hbm_to_vmem [thread:$0]  %s278, 1024, %s280, %s269, 64, 64, 4
        $region36: #{tpu_custom_call.1} parent=23 // pred_fallthru
          _
      $region24: #{tpu_custom_call.1} parent=5 // pred_fallthru
        _
      %p286 = scmp.le.s32.totalorder 1, %s19
      %p287 = scmp.lt.s32.totalorder %s19, 3
      %p288 = pnand %p286, %p287
      %p289 = pneg %p288
      // Predicated region
      $region37: #{tpu_custom_call.1} parent=5 // pred_check
        _
      $region38: #{tpu_custom_call.1} parent=5 // pred_check_branch
        %291 = sbr.rel (%p288) target = $region40
      $region39: #{tpu_custom_call.1} parent=5 // pred_region
        %s292 = ssub.s32 %s19, 1
        // Predicated region
        $region41: #{tpu_custom_call.1} parent=39 // pred_check
          %p293 = pneg %p57
        $region42: #{tpu_custom_call.1} parent=39 // pred_check_branch
          %295 = sbr.rel (%p293) target = $region44
        $region43: #{tpu_custom_call.1} parent=39 // pred_region
          %296 = dma.done [#allocation4], 128
        $region44: #{tpu_custom_call.1} parent=39 // pred_fallthru
          _
        %s297 = sand.u32 %s24, 1
        %s298 = scalar_lea.sflag [#allocation7], %s297
        %s299 = sand.u32 %s70, 1
        %s300 = smul.addr %s299, 64
        %s301 = scalar_lea.vmem [#allocation6], %s300
        // Predicated region
        $region45: #{tpu_custom_call.1} parent=39 // pred_check
          %p302 = pneg %p83
        $region46: #{tpu_custom_call.1} parent=39 // pred_check_branch
          %304 = sbr.rel (%p302) target = $region48
        $region47: #{tpu_custom_call.1} parent=39 // pred_region
          %305 = dma.done %s298, 1024
        $region48: #{tpu_custom_call.1} parent=39 // pred_fallthru
          _
        %s306 = sand.u32 %s24, 1
        %s307 = scalar_lea.sflag [#allocation7], %s306
        %s308 = sand.u32 %s96, 1
        %s309 = scalar_lea.vmem [#allocation8], %s308
        // Predicated region
        $region49: #{tpu_custom_call.1} parent=39 // pred_check
          %p310 = pneg %p109
        $region50: #{tpu_custom_call.1} parent=39 // pred_check_branch
          %312 = sbr.rel (%p310) target = $region52
        $region51: #{tpu_custom_call.1} parent=39 // pred_region
          %313 = dma.done %s307, 16
        $region52: #{tpu_custom_call.1} parent=39 // pred_fallthru
          _
        %s314 = sand.u32 %s24, 1
        %s315 = scalar_lea.sflag [#allocation10], %s314
        %s316 = sand.u32 %s122, 1
        %s317 = smul.addr %s316, 64
        %s318 = scalar_lea.vmem [#allocation9], %s317
        // Predicated region
        $region53: #{tpu_custom_call.1} parent=39 // pred_check
          %p319 = pneg %p135
        $region54: #{tpu_custom_call.1} parent=39 // pred_check_branch
          %321 = sbr.rel (%p319) target = $region56
        $region55: #{tpu_custom_call.1} parent=39 // pred_region
          %322 = dma.done %s315, 1024
        $region56: #{tpu_custom_call.1} parent=39 // pred_fallthru
          _
        // Predicated region
        $region57: #{tpu_custom_call.1} parent=39 // pred_check
          %p323 = pneg %p156
        $region58: #{tpu_custom_call.1} parent=39 // pred_check_branch
          %325 = sbr.rel (%p323) target = $region60
        $region59: #{tpu_custom_call.1} parent=39 // pred_region
          %326 = dma.done [#allocation10], 16
        $region60: #{tpu_custom_call.1} parent=39 // pred_fallthru
          _
        %p327 = pneg %p57
        %p328 = pneg %p54
        %s329 = sand.u32 %s24, 1
        %s330 = scalar_lea.sflag [#allocation7], %s329
        %s331 = sand.u32 %s70, 1
        %s332 = smul.addr %s331, 64
        %s333 = scalar_lea.vmem [#allocation6], %s332
        %p334 = pneg %p83
        %p335 = pneg %p80
        %s336 = sand.u32 %s24, 1
        %s337 = scalar_lea.sflag [#allocation7], %s336
        %s338 = sand.u32 %s96, 1
        %s339 = scalar_lea.vmem [#allocation8], %s338
        %p340 = pneg %p109
        %p341 = pneg %p106
        %s342 = sand.u32 %s24, 1
        %s343 = scalar_lea.sflag [#allocation10], %s342
        %s344 = sand.u32 %s122, 1
        %s345 = smul.addr %s344, 64
        %s346 = scalar_lea.vmem [#allocation9], %s345
        %p347 = pneg %p135
        %p348 = pneg %p132
        %p349 = pneg %p156
        %p350 = pneg %p153
        %p351 = pneg %p182
        %p352 = pneg %p179
        %s353 = smul.u32 2, %s28
        %s354 = smul.u32 16, %s29
        %s355 = smul.u32 2, %s28
        %p357 = scmp.eq.s32.totalorder %s29, 0
        // Predicated region
        $region61: #{tpu_custom_call.1} parent=39 // pred_check
          %p358 = pneg %p357
        $region62: #{tpu_custom_call.1} parent=39 // pred_check_branch
          %360 = sbr.rel (%p358) target = $region64
        $region63: #{tpu_custom_call.1} parent=39 // pred_region
          %361 = vst [vmem:[#allocation2] sm:$0xff] 0.0
          %362 = vst [vmem:[#allocation2 + $0x8] sm:$0xff] 0.0
        $region64: #{tpu_custom_call.1} parent=39 // pred_fallthru
          _
        %v363 = vld [vmem:[#allocation3] sm:$0xf]
        %v364 = vld [vmem:[#allocation3 + $0x4] sm:$0xf]
        %v365 = vld [vmem:[%s301] sm:$0xf]
        %v366 = vld [vmem:[%s301 + $0x4] sm:$0xf]
        %v367 = vld [vmem:[%s301 + $0x8] sm:$0xf]
        %v368 = vld [vmem:[%s301 + $0xc] sm:$0xf]
        %v369 = vld [vmem:[%s301 + $0x10] sm:$0xf]
        %v370 = vld [vmem:[%s301 + $0x14] sm:$0xf]
        %v371 = vld [vmem:[%s301 + $0x18] sm:$0xf]
        %v372 = vld [vmem:[%s301 + $0x1c] sm:$0xf]
        %v373 = vld [vmem:[%s301 + $0x20] sm:$0xf]
        %v374 = vld [vmem:[%s301 + $0x24] sm:$0xf]
        %v375 = vld [vmem:[%s301 + $0x28] sm:$0xf]
        %v376 = vld [vmem:[%s301 + $0x2c] sm:$0xf]
        %v377 = vld [vmem:[%s301 + $0x30] sm:$0xf]
        %v378 = vld [vmem:[%s301 + $0x34] sm:$0xf]
        %v379 = vld [vmem:[%s301 + $0x38] sm:$0xf]
        %v380 = vld [vmem:[%s301 + $0x3c] sm:$0xf]
        %v381 = vld [vmem:[%s309] sm:$0x1]
        %v383 = vlaneseq
        %v384 = vshrl.u32 %v383, 7
        %v385 = vsub.s32 0, %v384
        %v386 = vrot.slane %v381, %v385
        %v390 = vunpack.c.l.b16 %v363
        %v391 = vunpack.c.l.b16 %v364
        %v392 = vpack.c.b16 %v391, %v390
        %v410 = vunpack.c.l.b16 %v365
        %v411 = vunpack.c.l.b16 %v366
        %v412 = vunpack.c.l.b16 %v367
        %v413 = vunpack.c.l.b16 %v368
        %v414 = vunpack.c.l.b16 %v369
        %v415 = vunpack.c.l.b16 %v370
        %v416 = vunpack.c.l.b16 %v371
        %v417 = vunpack.c.l.b16 %v372
        %v418 = vunpack.c.l.b16 %v373
        %v419 = vunpack.c.l.b16 %v374
        %v420 = vunpack.c.l.b16 %v375
        %v421 = vunpack.c.l.b16 %v376
        %v422 = vunpack.c.l.b16 %v377
        %v423 = vunpack.c.l.b16 %v378
        %v424 = vunpack.c.l.b16 %v379
        %v425 = vunpack.c.l.b16 %v380
        %v426 = vpack.c.b16 %v411, %v410
        %v427 = vpack.c.b16 %v413, %v412
        %v428 = vpack.c.b16 %v415, %v414
        %v429 = vpack.c.b16 %v417, %v416
        %v430 = vpack.c.b16 %v419, %v418
        %v431 = vpack.c.b16 %v421, %v420
        %v432 = vpack.c.b16 %v423, %v422
        %v433 = vpack.c.b16 %v425, %v424
        %442 = vmatprep.subr.bf16.mxu0 0
        %443 = vmatpush1.bf16.msra.mxu0 %v426
        %444 = vmatprep.subr.bf16.mxu0 0
        %445 = vmatpush1.bf16.msra.mxu0 %v427
        %446 = vmatprep.subr.bf16.mxu0 0
        %447 = vmatpush1.bf16.msra.mxu0 %v428
        %448 = vmatprep.subr.bf16.mxu0 0
        %449 = vmatpush1.bf16.msra.mxu0 %v429
        %450 = vmatprep.subr.bf16.mxu0 0
        %451 = vmatpush1.bf16.msra.mxu0 %v430
        %452 = vmatprep.subr.bf16.mxu0 0
        %453 = vmatpush1.bf16.msra.mxu0 %v431
        %454 = vmatprep.subr.bf16.mxu0 0
        %455 = vmatpush1.bf16.msra.mxu0 %v432
        %456 = vmatprep.subr.bf16.mxu0 0
        %457 = vmatpush1.bf16.msra.mxu0 %v433
        %458 = vmatprep.subr.bf16.mxu0 0
        %459 = vmatpush1.bf16.msra.mxu0 0
        %460 = vmatprep.subr.bf16.mxu0 0
        %461 = vmatpush1.bf16.msra.mxu0 0
        %462 = vmatprep.subr.bf16.mxu0 0
        %463 = vmatpush1.bf16.msra.mxu0 0
        %464 = vmatprep.subr.bf16.mxu0 0
        %465 = vmatpush1.bf16.msra.mxu0 0
        %466 = vmatprep.subr.bf16.mxu0 0
        %467 = vmatpush1.bf16.msra.mxu0 0
        %468 = vmatprep.subr.bf16.mxu0 0
        %469 = vmatpush1.bf16.msra.mxu0 0
        %470 = vmatprep.subr.bf16.mxu0 0
        %471 = vmatpush1.bf16.msra.mxu0 0
        %472 = vmatprep.subr.bf16.mxu0 0
        %473 = vmatpush1.bf16.msra.mxu0 0
        %474 = vmatprep.mubr.bf16.mxu0 0
        %475 = vmatmul.mubr.bf16.gmra.mrb[0].mxu0 %v392
        %v476 = vpop.f32.mrb[0].mxu0
        %v477 = vadd.f32 %v386, %v476
        %v478 = vpop.f32.mrb[0].mxu0
        %v479 = vpop.f32.mrb[0].mxu0
        %v480 = vadd.f32 %v386, %v479
        %v481 = vpop.f32.mrb[0].mxu0
        %482 = vdwg.mxu0
        %v483 = vmul.f32 %v477, 0.5
        %v484 = vmul.f32 %v480, 0.5
        %v485 = vmul.f32 %v477, 0.70710677
        %v486 = vmul.f32 %v480, 0.70710677
        %v487 = verf.f32.pop %v485
        %v488 = verf.f32.pop %v486
        %v489 = vadd.f32 %v487, 1.0
        %v490 = vadd.f32 %v488, 1.0
        %v491 = vmul.f32 %v483, %v489
        %v492 = vmul.f32 %v484, %v490
        %v493 = vld [vmem:[#allocation2] sm:$0xff]
        %v494 = vld [vmem:[#allocation2 + $0x8] sm:$0xff]
        %v495 = vpack.c.bf16 %v492, %v491
        %v496 = vld [vmem:[%s318] sm:$0xf]
        %v497 = vld [vmem:[%s318 + $0x4] sm:$0xf]
        %v498 = vld [vmem:[%s318 + $0x8] sm:$0xf]
        %v499 = vld [vmem:[%s318 + $0xc] sm:$0xf]
        %v500 = vld [vmem:[%s318 + $0x10] sm:$0xf]
        %v501 = vld [vmem:[%s318 + $0x14] sm:$0xf]
        %v502 = vld [vmem:[%s318 + $0x18] sm:$0xf]
        %v503 = vld [vmem:[%s318 + $0x1c] sm:$0xf]
        %v504 = vld [vmem:[%s318 + $0x20] sm:$0xf]
        %v505 = vld [vmem:[%s318 + $0x24] sm:$0xf]
        %v506 = vld [vmem:[%s318 + $0x28] sm:$0xf]
        %v507 = vld [vmem:[%s318 + $0x2c] sm:$0xf]
        %v508 = vld [vmem:[%s318 + $0x30] sm:$0xf]
        %v509 = vld [vmem:[%s318 + $0x34] sm:$0xf]
        %v510 = vld [vmem:[%s318 + $0x38] sm:$0xf]
        %v511 = vld [vmem:[%s318 + $0x3c] sm:$0xf]
        %v528 = vunpack.c.l.b16 %v496
        %v529 = vunpack.c.l.b16 %v497
        %v530 = vunpack.c.l.b16 %v498
        %v531 = vunpack.c.l.b16 %v499
        %v532 = vunpack.c.l.b16 %v500
        %v533 = vunpack.c.l.b16 %v501
        %v534 = vunpack.c.l.b16 %v502
        %v535 = vunpack.c.l.b16 %v503
        %v536 = vunpack.c.l.b16 %v504
        %v537 = vunpack.c.l.b16 %v505
        %v538 = vunpack.c.l.b16 %v506
        %v539 = vunpack.c.l.b16 %v507
        %v540 = vunpack.c.l.b16 %v508
        %v541 = vunpack.c.l.b16 %v509
        %v542 = vunpack.c.l.b16 %v510
        %v543 = vunpack.c.l.b16 %v511
        %v544 = vpack.c.b16 %v529, %v528
        %v545 = vpack.c.b16 %v531, %v530
        %v546 = vpack.c.b16 %v533, %v532
        %v547 = vpack.c.b16 %v535, %v534
        %v548 = vpack.c.b16 %v537, %v536
        %v549 = vpack.c.b16 %v539, %v538
        %v550 = vpack.c.b16 %v541, %v540
        %v551 = vpack.c.b16 %v543, %v542
        %560 = vmatprep.subr.bf16.mxu0 0
        %561 = vmatpush1.bf16.msra.mxu0 %v544
        %562 = vmatprep.subr.bf16.mxu0 0
        %563 = vmatpush1.bf16.msra.mxu0 %v545
        %564 = vmatprep.subr.bf16.mxu0 0
        %565 = vmatpush1.bf16.msra.mxu0 %v546
        %566 = vmatprep.subr.bf16.mxu0 0
        %567 = vmatpush1.bf16.msra.mxu0 %v547
        %568 = vmatprep.subr.bf16.mxu0 0
        %569 = vmatpush1.bf16.msra.mxu0 %v548
        %570 = vmatprep.subr.bf16.mxu0 0
        %571 = vmatpush1.bf16.msra.mxu0 %v549
        %572 = vmatprep.subr.bf16.mxu0 0
        %573 = vmatpush1.bf16.msra.mxu0 %v550
        %574 = vmatprep.subr.bf16.mxu0 0
        %575 = vmatpush1.bf16.msra.mxu0 %v551
        %576 = vmatprep.subr.bf16.mxu0 0
        %577 = vmatpush1.bf16.msra.mxu0 0
        %578 = vmatprep.subr.bf16.mxu0 0
        %579 = vmatpush1.bf16.msra.mxu0 0
        %580 = vmatprep.subr.bf16.mxu0 0
        %581 = vmatpush1.bf16.msra.mxu0 0
        %582 = vmatprep.subr.bf16.mxu0 0
        %583 = vmatpush1.bf16.msra.mxu0 0
        %584 = vmatprep.subr.bf16.mxu0 0
        %585 = vmatpush1.bf16.msra.mxu0 0
        %586 = vmatprep.subr.bf16.mxu0 0
        %587 = vmatpush1.bf16.msra.mxu0 0
        %588 = vmatprep.subr.bf16.mxu0 0
        %589 = vmatpush1.bf16.msra.mxu0 0
        %590 = vmatprep.subr.bf16.mxu0 0
        %591 = vmatpush1.bf16.msra.mxu0 0
        %592 = vmatprep.mubr.bf16.mxu0 0
        %593 = vmatmul.mubr.bf16.gmra.mrb[0].mxu0 %v495
        %v594 = vpop.f32.mrb[0].mxu0
        %v595 = vadd.f32 0.0, %v594
        %v596 = vpop.f32.mrb[0].mxu0
        %v597 = vpop.f32.mrb[0].mxu0
        %v598 = vadd.f32 0.0, %v597
        %v599 = vpop.f32.mrb[0].mxu0
        %600 = vdwg.mxu0
        %v601 = vadd.f32 %v493, %v595
        %v602 = vadd.f32 %v494, %v598
        %603 = vst [vmem:[#allocation2] sm:$0xff] %v601
        %604 = vst [vmem:[#allocation2 + $0x8] sm:$0xff] %v602
        %p605 = scmp.eq.s32.totalorder %s29, 1
        // Predicated region
        $region65: #{tpu_custom_call.1} parent=39 // pred_check
          %p606 = pneg %p605
        $region66: #{tpu_custom_call.1} parent=39 // pred_check_branch
          %608 = sbr.rel (%p606) target = $region68
        $region67: #{tpu_custom_call.1} parent=39 // pred_region
          %v609 = vld [vmem:[#allocation2] sm:$0xff]
          %v610 = vld [vmem:[#allocation2 + $0x8] sm:$0xff]
          %v611 = vld [vmem:[#allocation11] sm:$0x1]
          %v613 = vlaneseq
          %v614 = vshrl.u32 %v613, 7
          %v615 = vsub.s32 0, %v614
          %v616 = vrot.slane %v611, %v615
          %v618 = vadd.f32 %v609, %v616
          %v619 = vadd.f32 %v610, %v616
          %620 = vst [vmem:[#allocation12] sm:$0xff] %v618
          %621 = vst [vmem:[#allocation12 + $0x8] sm:$0xff] %v619
        $region68: #{tpu_custom_call.1} parent=39 // pred_fallthru
          _
        // Predicated region
        $region69: #{tpu_custom_call.1} parent=39 // pred_check
          %p622 = pneg %p179
        $region70: #{tpu_custom_call.1} parent=39 // pred_check_branch
          %624 = sbr.rel (%p622) target = $region72
        $region71: #{tpu_custom_call.1} parent=39 // pred_region
          %s625 = smul.u32 2, %s28
          %s627 = ssub.s32 256, 256
          %628 = vsyncadd [#allocation5], %s627
          %s629 = smul.addr %s625, 128
          %s630 = scalar_lea.hbm %s5, %s629
          %s631 = sshll.u32 [#allocation12], 4
          %s632 = int_to_ptr.vmem [resolvable:$true] %s631
          %637 = dma.vmem_to_hbm [thread:$0]  %s632, 256, %s630, [#allocation5], 128, 128, 8
        $region72: #{tpu_custom_call.1} parent=39 // pred_fallthru
          _
        // Predicated region
        $region73: #{tpu_custom_call.1} parent=39 // pred_check
          %p638 = pneg %p179
        $region74: #{tpu_custom_call.1} parent=39 // pred_check_branch
          %640 = sbr.rel (%p638) target = $region76
        $region75: #{tpu_custom_call.1} parent=39 // pred_region
          %641 = dma.done [#allocation5], 256
        $region76: #{tpu_custom_call.1} parent=39 // pred_fallthru
          _
      $region40: #{tpu_custom_call.1} parent=5 // pred_fallthru
        _
      %p642 = scmp.le.s32.totalorder 2, %s19
      // Predicated region
      $region77: #{tpu_custom_call.1} parent=5 // pred_check
        %p643 = pneg %p642
      $region78: #{tpu_custom_call.1} parent=5 // pred_check_branch
        %645 = sbr.rel (%p643) target = $region80
      $region79: #{tpu_custom_call.1} parent=5 // pred_region
        %s646 = ssub.s32 %s19, 2
      $region80: #{tpu_custom_call.1} parent=5 // pred_fallthru
        _
    $region6: #{tpu_custom_call.1} parent=1 // loop_footer
      %s23 = sadd.s32 1, %s19
    $region7: #{tpu_custom_call.1} parent=1 // loop_footer_branch
      %18 = sbr.rel target = $region3
    $region8: #{tpu_custom_call.1} parent=1 // loop_exit
      _
    %647 = vsyncpa [#allocation4], 1
    %s648 = scalar_lea.sflag [#allocation4], 1
    %649 = vsyncpa %s648, 1
    %650 = vsyncpa [#allocation7], 1
    %s651 = scalar_lea.sflag [#allocation7], 1
    %652 = vsyncpa %s651, 1
    %653 = vsyncpa [#allocation10], 1
    %s654 = scalar_lea.sflag [#allocation10], 1
    %655 = vsyncpa %s654, 1
    %656 = vsyncpa [#allocation5], 1
    %s657 = scalar_lea.sflag [#allocation5], 1
    %658 = vsyncpa %s657, 1

</llo_original>
